<compile_context>
chip_gen: v7x
topology: tpu7x:2x2x1
jax: 0.10.0
libtpu: 0.0.40
codegen_flags: <defaults>
</compile_context>

<pallas_src>
import functools

import jax
import jax.numpy as jnp
from jax.experimental import pallas as pl
from jax.experimental.pallas import tpu as pltpu


def _pick_seq_tile(n, target):
    """Largest tile <= target that divides n and is a multiple of 8 (sublane),
    falling back to the whole sequence (block == full dim is always legal)."""
    if n <= target:
        return n
    best = None
    for t in range(8, target + 1, 8):
        if n % t == 0:
            best = t
    return best if best is not None else n


def _vmem_limit_bytes():
    """Scoped VMEM limit with ~25% headroom vs. physical (64 MiB on v7x,
    128 MiB on v5e/v6e); None -> compiler default if the query is unavailable."""
    try:
        return int(pltpu.get_tpu_info().vmem_capacity_bytes * 0.75)
    except Exception:
        return None


def _compiler_params(n_parallel_dims):
    return pltpu.CompilerParams(
        dimension_semantics=("parallel",) * n_parallel_dims,
        vmem_limit_bytes=_vmem_limit_bytes())


# ---------------------------------------------------------------------------
# Stage 1: fused QKV projection   qkv = x @ [Wq*scale | Wk | Wv]
# ---------------------------------------------------------------------------
def _qkv_proj_kernel(x_ref, w_ref, o_ref):
    o_ref[0] = jnp.dot(x_ref[0], w_ref[...],
                       preferred_element_type=jnp.float32).astype(o_ref.dtype)


def _qkv_projection(x, w_fused, *, seq_tile):
    b, n, dim = x.shape
    three_inner = w_fused.shape[1]
    ts = seq_tile
    return pl.pallas_call(
        _qkv_proj_kernel,
        out_shape=jax.ShapeDtypeStruct((b, n, three_inner), x.dtype),
        grid=(b, n // ts),
        in_specs=[
            pl.BlockSpec((1, ts, dim), lambda bi, si: (bi, si, 0)),
            pl.BlockSpec((dim, three_inner), lambda bi, si: (0, 0)),
        ],
        out_specs=pl.BlockSpec((1, ts, three_inner), lambda bi, si: (bi, si, 0)),
        compiler_params=_compiler_params(2),
    )(x, w_fused)


# ---------------------------------------------------------------------------
# Stage 2: attention over q-tiles
# ---------------------------------------------------------------------------
def _attention_kernel(talk_ref,              # SMEM (H, H) f32 talking-heads weights
                      q_ref,                 # VMEM (1, H, TQ, D)  (scale folded in)
                      k_ref, v_ref,          # VMEM (1, H, N, D)
                      nullk_ref, nullv_ref,  # VMEM (H, D)
                      wo_ref,                # VMEM (INNER, DIM)
                      o_ref,                 # VMEM (1, TQ, DIM)
                      acc_ref,               # VMEM scratch (TQ, INNER)
                      *, heads, dim_head, q_tile, causal):
    cdt = v_ref.dtype

    q = q_ref[0]                             # (H, TQ, D)
    k = k_ref[0]                             # (H, N, D)
    v = v_ref[0]                             # (H, N, D)

    # Batched-over-heads QK^T on the MXU (inputs in x.dtype, f32 accumulate).
    sim = jax.lax.dot_general(q, k, (((2,), (2,)), ((0,), (0,))),
                              preferred_element_type=jnp.float32)   # (H, TQ, N)

    # Learned null key handled as a separate column (no N+1 concatenate).
    null_logit = jnp.sum(q.astype(jnp.float32)
                         * nullk_ref[...].astype(jnp.float32)[:, None, :],
                         axis=-1, keepdims=True)                    # (H, TQ, 1)

    if causal:
        # torch: triu_(j - i + 1) with kv = [null, keys...]  ->  key t masked iff t > row
        mask_value = -jnp.finfo(jnp.float32).max
        row = (jax.lax.broadcasted_iota(jnp.int32, sim.shape, 1)
               + pl.program_id(1) * q_tile)
        col = jax.lax.broadcasted_iota(jnp.int32, sim.shape, 2)
        sim = jnp.where(col > row, mask_value, sim)

    # Softmax in f32; the null column participates in the row max / sum.
    m = jnp.maximum(jnp.max(sim, axis=-1, keepdims=True), null_logit)  # (H, TQ, 1)
    p = jnp.exp(sim - m)                                               # (H, TQ, N)
    p_null = jnp.exp(null_logit - m)                                   # (H, TQ, 1)
    l = jnp.sum(p, axis=-1, keepdims=True) + p_null
    r = pl.reciprocal(l, approx=True)                                  # EUP, not VPU

    # Talking heads: mixed[g] = sum_h talk[g, h] * softmax_h
    # (softmax normalization folded in; each source-head slab touched once).
    mixed = [None] * heads
    mixed_null = [None] * heads
    for h in range(heads):
        ph = p[h] * r[h]                     # (TQ, N)  normalized probs, head h
        pnh = p_null[h] * r[h]               # (TQ, 1)
        for g in range(heads):
            w = talk_ref[g, h]
            tg = ph * w
            tn = pnh * w
            mixed[g] = tg if mixed[g] is None else mixed[g] + tg
            mixed_null[g] = tn if mixed_null[g] is None else mixed_null[g] + tn

    # Per-head PV matmul (contraction over N on the MXU) + null-value term;
    # head outputs land lane-dense in the (TQ, INNER) scratch (no lane concat).
    for g in range(heads):
        og = jnp.dot(mixed[g].astype(cdt), v[g],
                     preferred_element_type=jnp.float32)               # (TQ, D)
        og = og + mixed_null[g] * nullv_ref[g:g + 1, :].astype(jnp.float32)
        acc_ref[:, g * dim_head:(g + 1) * dim_head] = og.astype(cdt)

    # Output projection as a single lane-dense matmul.
    o_ref[0] = jnp.dot(acc_ref[...], wo_ref[...],
                       preferred_element_type=jnp.float32).astype(o_ref.dtype)


def attention_forward(x, params, *, heads, dim_head, causal=False,
                      q_tile_target=128, proj_tile_target=512):
    b, n, dim = x.shape
    inner = heads * dim_head
    scale = dim_head ** -0.5
    cdt = x.dtype

    # Fold the softmax scale into Wq (in f32) and fuse the three projections.
    wq = params["wq"].astype(jnp.float32) * scale                  # (inner, dim)
    w_fused = jnp.concatenate(
        [wq, params["wk"].astype(jnp.float32), params["wv"].astype(jnp.float32)],
        axis=0).T.astype(cdt)                                      # (dim, 3*inner)

    null_k = params["null_k"].reshape(heads, dim_head).astype(cdt)
    null_v = params["null_v"].reshape(heads, dim_head).astype(cdt)
    talk = params["talk"].reshape(heads, heads).astype(jnp.float32)
    wo_t = params["wo"].T.astype(cdt)                              # (inner, dim)

    # ---- stage 1: fused QKV projection (Pallas) ----
    ts = _pick_seq_tile(n, proj_tile_target)
    qkv = _qkv_projection(x, w_fused, seq_tile=ts)                 # (b, n, 3*inner)

    # Wrapper-side layout plumbing: split heads -> (b, h, n, d).
    def _split(t):
        return t.reshape(b, n, heads, dim_head).transpose(0, 2, 1, 3)

    qh = _split(qkv[..., :inner])
    kh = _split(qkv[..., inner:2 * inner])
    vh = _split(qkv[..., 2 * inner:])

    # ---- stage 2: attention (Pallas) ----
    # q-tile size keeps the live f32 attention slabs at ~2*H*TQ*N*4B (+ K/V),
    # well under the scoped VMEM limit on v7x (64 MiB) and v5e/v6e (128 MiB).
    tq = _pick_seq_tile(n, q_tile_target)
    n_q = n // tq

    kernel = functools.partial(_attention_kernel, heads=heads, dim_head=dim_head,
                               q_tile=tq, causal=causal)

    return pl.pallas_call(
        kernel,
        out_shape=jax.ShapeDtypeStruct((b, n, dim), x.dtype),
        grid=(b, n_q),
        in_specs=[
            pl.BlockSpec(memory_space=pltpu.MemorySpace.SMEM),                    # talk
            pl.BlockSpec((1, heads, tq, dim_head), lambda bi, qi: (bi, 0, qi, 0)),  # q tile
            pl.BlockSpec((1, heads, n, dim_head), lambda bi, qi: (bi, 0, 0, 0)),    # k
            pl.BlockSpec((1, heads, n, dim_head), lambda bi, qi: (bi, 0, 0, 0)),    # v
            pl.BlockSpec((heads, dim_head), lambda bi, qi: (0, 0)),                 # null_k
            pl.BlockSpec((heads, dim_head), lambda bi, qi: (0, 0)),                 # null_v
            pl.BlockSpec((inner, dim), lambda bi, qi: (0, 0)),                      # Wout^T
        ],
        out_specs=pl.BlockSpec((1, tq, dim), lambda bi, qi: (bi, qi, 0)),
        scratch_shapes=[pltpu.VMEM((tq, inner), cdt)],
        compiler_params=_compiler_params(2),
    )(talk, qh, kh, vh, null_k, null_v, wo_t)


def attention_reference(x, params, *, heads, dim_head, causal=False):
    """Pure-JAX reference mirroring the PyTorch forward (no context/mask/rotary)."""
    b, n, dim = x.shape
    scale = dim_head ** -0.5
    q = x @ params["wq"].T
    k = x @ params["wk"].T
    v = x @ params["wv"].T

    def split(t):
        return t.reshape(b, n, heads, dim_head).transpose(0, 2, 1, 3)

    q, k, v = map(split, (q, k, v))
    null_k = jnp.broadcast_to(params["null_k"][None], (b, heads, 1, dim_head))
    null_v = jnp.broadcast_to(params["null_v"][None], (b, heads, 1, dim_head))
    k = jnp.concatenate([null_k, k], axis=2)
    v = jnp.concatenate([null_v, v], axis=2)
    q = q * scale
    sim = jnp.einsum("bhid,bhjd->bhij", q, k)
    if causal:
        i, j = sim.shape[-2:]
        ii = jnp.arange(i)[:, None]
        jj = jnp.arange(j)[None, :]
        sim = jnp.where((jj - ii) >= (j - i + 1), -jnp.finfo(x.dtype).max, sim)
    attn = jax.nn.softmax(sim.astype(jnp.float32), axis=-1)
    talk = params["talk"].reshape(heads, heads)
    attn = jnp.einsum("gh,bhij->bgij", talk, attn)
    out = jnp.einsum("bhij,bhjd->bhid", attn, v)
    out = out.transpose(0, 2, 1, 3).reshape(b, n, heads * dim_head)
    return out @ params["wo"].T


if __name__ == "__main__":
    # small shapes: batch=2, seq=8, dim=32, heads=4, dim_head=16
    B, N, DIM = 2, 8, 32
    HEADS, DIM_HEAD = 4, 16
    INNER = HEADS * DIM_HEAD

    key = jax.random.PRNGKey(0)
    kx, kq, kk, kv, ko, knk, knv, kt = jax.random.split(key, 8)

    x = jax.random.normal(kx, (B, N, DIM), dtype=jnp.float32)
    params = {
        # PyTorch nn.Linear weight convention: (out_features, in_features)
        "wq": jax.random.normal(kq, (INNER, DIM), dtype=jnp.float32) * 0.02,
        "wk": jax.random.normal(kk, (INNER, DIM), dtype=jnp.float32) * 0.02,
        "wv": jax.random.normal(kv, (INNER, DIM), dtype=jnp.float32) * 0.02,
        "wo": jax.random.normal(ko, (DIM, INNER), dtype=jnp.float32) * 0.02,
        "null_k": jax.random.normal(knk, (HEADS, 1, DIM_HEAD), dtype=jnp.float32),
        "null_v": jax.random.normal(knv, (HEADS, 1, DIM_HEAD), dtype=jnp.float32),
        # Conv2d(heads, heads, 1, bias=False) weight: (h_out, h_in, 1, 1)
        "talk": jax.random.normal(kt, (HEADS, HEADS, 1, 1), dtype=jnp.float32) * 0.1,
    }

    for causal in (False, True):
        out = attention_forward(x, params, heads=HEADS, dim_head=DIM_HEAD, causal=causal)
        out = jax.block_until_ready(out)
        ref = attention_reference(x, params, heads=HEADS, dim_head=DIM_HEAD, causal=causal)
        ref = jax.block_until_ready(ref)
        assert out.shape == (B, N, DIM)
        err = float(jnp.max(jnp.abs(out - ref)))
        assert jnp.allclose(out, ref, atol=1e-2, rtol=1e-2), (causal, err)

    print("KERNEL_OK")
</pallas_src>

<mosaic_0001>
module attributes {stable_mosaic.version = 11 : i64} {
  func.func @_qkv_proj_kernel(%arg0: i32, %arg1: i32, %arg2: memref<1x8x32xf32, #tpu.memory_space<vmem>>, %arg3: memref<32x192xf32, #tpu.memory_space<vmem>>, %arg4: memref<1x8x192xf32, #tpu.memory_space<vmem>>) attributes {dimension_semantics = [#tpu.dimension_semantics<parallel>, #tpu.dimension_semantics<parallel>], iteration_bounds = array<i64: 2, 1>, scalar_prefetch = 0 : i64, scratch_operands = 0 : i64, tpu.core_type = #tpu.core_type<tc>, window_params = [{transform_indices = @transform_0, window_bounds = array<i64: 1, 8, 32>}, {pipeline_mode = #tpu.pipeline_mode<synchronous>, transform_indices = @transform_1, window_bounds = array<i64: 32, 192>}, {transform_indices = @transform_2, window_bounds = array<i64: 1, 8, 192>}]} {
    %c0 = arith.constant 0 : index
    %c0_0 = arith.constant 0 : index
    %c0_1 = arith.constant 0 : index
    %0 = vector.load %arg2[%c0, %c0_0, %c0_1] : memref<1x8x32xf32, #tpu.memory_space<vmem>>, vector<1x8x32xf32>
    %1 = vector.shape_cast %0 : vector<1x8x32xf32> to vector<8x32xf32>
    %c0_2 = arith.constant 0 : index
    %c0_3 = arith.constant 0 : index
    %2 = vector.load %arg3[%c0_2, %c0_3] : memref<32x192xf32, #tpu.memory_space<vmem>>, vector<32x192xf32>
    %cst = arith.constant dense<0.000000e+00> : vector<8x192xf32>
    %3 = tpu.matmul %1, %2, %cst {dimension_numbers = #tpu.dot_dimension_numbers<[1], [0], [0], [1], [0, 0, 1, 1], [], []>} : vector<8x32xf32>, vector<32x192xf32>, vector<8x192xf32> -> vector<8x192xf32>
    %c0_4 = arith.constant 0 : index
    %c0_5 = arith.constant 0 : index
    %c0_6 = arith.constant 0 : index
    %4 = vector.load %arg4[%c0_4, %c0_5, %c0_6] : memref<1x8x192xf32, #tpu.memory_space<vmem>>, vector<1x8x192xf32>
    %5 = vector.shape_cast %4 : vector<1x8x192xf32> to vector<8x192xf32>
    %6 = vector.shape_cast %3 : vector<8x192xf32> to vector<1x8x192xf32>
    tpu.vector_store %arg4[%c0_4, %c0_5, %c0_6], %6 {strides = array<i32>} : memref<1x8x192xf32, #tpu.memory_space<vmem>>, vector<1x8x192xf32>,
    return
  }
  func.func @transform_0(%arg0: i32, %arg1: i32) -> (i32, i32, i32) {
    %c0_i32 = arith.constant 0 : i32
    %c0_i32_0 = arith.constant 0 : i32
    return %arg0, %arg1, %c0_i32 : i32, i32, i32
  }
  func.func @transform_1(%arg0: i32, %arg1: i32) -> (i32, i32) {
    %c0_i32 = arith.constant 0 : i32
    %c0_i32_0 = arith.constant 0 : i32
    %c0_i32_1 = arith.constant 0 : i32
    return %c0_i32, %c0_i32_0 : i32, i32
  }
  func.func @transform_2(%arg0: i32, %arg1: i32) -> (i32, i32, i32) {
    %c0_i32 = arith.constant 0 : i32
    %c0_i32_0 = arith.constant 0 : i32
    return %arg0, %arg1, %c0_i32 : i32, i32, i32
  }
}

</mosaic_0001>

<llo_original>
// kernel: tpu_custom_call.1
$region0: #{tpu_custom_call.1}
  #allocation0 [shape = 'u32[]', space=smem, size = 0x4, offset = 0x4, fixed_abs, tag = 'smem constant byte address 0x4 - core index']
  #allocation1 [shape = 'u32[144,128]{1,0:T(1,128)}', space=vmem, size = 0x12000, scoped, tag = 'internal scratch']
  %s0 = inlined_call_operand.hbm [shape: f32[2,8,32], index: 0, kind: input, shape index: {}]
  %s1 = inlined_call_operand.hbm [shape: f32[32,192], index: 1, kind: input, shape index: {}]
  %s2 = inlined_call_operand.hbm [shape: f32[2,8,192], index: 2, kind: output, shape index: {}]
  %s3 = sld [smem:[#allocation0]]
  $region49: #{tpu_custom_call.1} parent=0
    _
  %s5 = ssub.s32 1, %s3
  %s6 = scalar_select 0, %s5, %s3
  $region1: #{tpu_custom_call.1} parent=0
    #allocation2 [shape = 'u8[8192]{0}', space=vmem, size = 0x2000, scoped, tag = 'input window, operand 0']
    #allocation3 [shape = 's32[2]{0}', space=sflag, size = 0x8, scoped, tag = 'scoped memory for tpu_custom_call.1']
    #allocation4 [shape = 's32[2]{0}', space=sflag, size = 0x8, scoped, tag = 'scoped memory for tpu_custom_call.1']
    #allocation5 [shape = 'u8[32768]{0}', space=vmem, size = 0x8000, scoped, tag = 'input window, operand 1, single buffered']
    #allocation6 [shape = 's32[1]{0}', space=sflag, size = 0x4, scoped, tag = 'scoped memory for tpu_custom_call.1']
    #allocation7 [shape = 'u8[16384]{0}', space=vmem, size = 0x4000, scoped, tag = 'output window, operand 0']
    %7 = vsyncpa [#allocation3], 0
    %s8 = scalar_lea.sflag [#allocation3], 1
    %9 = vsyncpa %s8, 0
    %10 = vsyncpa [#allocation6], 0
    %11 = vsyncpa [#allocation4], 0
    %s12 = scalar_lea.sflag [#allocation4], 1
    %13 = vsyncpa %s12, 0
    loop: start=0, step=1, limit=4
    $region2: #{tpu_custom_call.1} parent=1 // loop_pre_header
      _
    $region3: #{tpu_custom_call.1} parent=1 // loop_header
      %s15 = sphi 0, %s19
      %p16 = scmp.ge.s32.totalorder %s15, 4
      %s22 = sphi 0, %s34
      %s23 = sphi 0, %s30
      %s24 = sphi 0, %s22
      %s25 = sphi 0, %s23
      %s26 = sphi 0, %s24
      %s27 = sphi 0, %s25
      %s39 = sphi 0, %s41
      %s42 = sphi 0, %s39
      %s43 = sphi 0, %s42
      %s59 = sphi 0, %s43
      %s63 = sphi 0, %s63
      %s65 = sphi 0, %s63
      %s66 = sphi 0, %s65
      %s80 = sphi 0, %s66
      %s88 = sphi 0, %s90
      %s91 = sphi 0, %s88
      %s92 = sphi 0, %s91
      %s108 = sphi 0, %s92
    $region4: #{tpu_custom_call.1} parent=1 // loop_header_branch
      %18 = sbr.rel (%p16) target = $region8
    $region5: #{tpu_custom_call.1} parent=1 // loop_body
      %s20 = ssub.s32 %s15, 1
      %s21 = ssub.s32 %s15, 2
      %s28 = sadd.s32 1, %s23
      %p29 = scmp.ge.s32.totalorder %s28, 1
      %s30 = scalar_select %p29, 0, %s28
      %s31 = sadd.s32 1, %s22
      %s32 = scalar_select %p29, %s31, %s22
      %p33 = scmp.ge.s32.totalorder %s32, 2
      %s34 = scalar_select %p33, 0, %s32
      %s35 = ssub.s32 %s22, %s34
      %s36 = ssub.s32 %s23, %s30
      %s37 = sor.u32 %s35, %s36
      %p38 = scmp.eq.s32.totalorder %s37, 0
      %s40 = sadd.s32 %s39, 1
      %s41 = scalar_select %p38, %s39, %s40
      %p44 = pneg %p38
      %p45 = scmp.eq.s32.totalorder %s15, 1
      %p46 = por %p44, %p45
      %p47 = scmp.ne.s32.totalorder %s39, %s42
      %p48 = scmp.eq.s32.totalorder %s15, 0
      %p49 = por %p47, %p48
      %p50 = scmp.ne.s32.totalorder %s39, %s42
      %p51 = scmp.eq.s32.totalorder %s20, 1
      %p52 = por %p50, %p51
      %p53 = scmp.ne.s32.totalorder %s42, %s43
      %p54 = scmp.eq.s32.totalorder %s20, 0
      %p55 = por %p53, %p54
      %p56 = scmp.ne.s32.totalorder %s42, %s43
      %p57 = scmp.eq.s32.totalorder %s21, 1
      %p58 = por %p56, %p57
      %p60 = scmp.ne.s32.totalorder %s43, %s59
      %p61 = scmp.eq.s32.totalorder %s21, 0
      %p62 = por %p60, %p61
      %s64 = sadd.s32 %s63, 1
      %p67 = scmp.eq.s32.totalorder %s15, 1
      %p68 = scmp.ne.s32.totalorder %s63, %s65
      %p69 = scmp.eq.s32.totalorder %s15, 0
      %p70 = por %p68, %p69
      %p71 = scmp.ne.s32.totalorder %s63, %s65
      %p72 = scmp.eq.s32.totalorder %s20, 1
      %p73 = por %p71, %p72
      %p74 = scmp.ne.s32.totalorder %s65, %s66
      %p75 = scmp.eq.s32.totalorder %s20, 0
      %p76 = por %p74, %p75
      %p77 = scmp.ne.s32.totalorder %s65, %s66
      %p78 = scmp.eq.s32.totalorder %s21, 1
      %p79 = por %p77, %p78
      %p81 = scmp.ne.s32.totalorder %s66, %s80
      %p82 = scmp.eq.s32.totalorder %s21, 0
      %p83 = por %p81, %p82
      %s84 = ssub.s32 %s22, %s34
      %s85 = ssub.s32 %s23, %s30
      %s86 = sor.u32 %s84, %s85
      %p87 = scmp.eq.s32.totalorder %s86, 0
      %s89 = sadd.s32 %s88, 1
      %s90 = scalar_select %p87, %s88, %s89
      %p93 = pneg %p87
      %p94 = scmp.eq.s32.totalorder %s15, 1
      %p95 = por %p93, %p94
      %p96 = scmp.ne.s32.totalorder %s88, %s91
      %p97 = scmp.eq.s32.totalorder %s15, 0
      %p98 = por %p96, %p97
      %p99 = scmp.ne.s32.totalorder %s88, %s91
      %p100 = scmp.eq.s32.totalorder %s20, 1
      %p101 = por %p99, %p100
      %p102 = scmp.ne.s32.totalorder %s91, %s92
      %p103 = scmp.eq.s32.totalorder %s20, 0
      %p104 = por %p102, %p103
      %p105 = scmp.ne.s32.totalorder %s91, %s92
      %p106 = scmp.eq.s32.totalorder %s21, 1
      %p107 = por %p105, %p106
      %p109 = scmp.ne.s32.totalorder %s92, %s108
      %p110 = scmp.eq.s32.totalorder %s21, 0
      %p111 = por %p109, %p110
      %p112 = scmp.le.s32.totalorder 1, %s15
      %p113 = scmp.lt.s32.totalorder %s15, 3
      %p114 = pnand %p112, %p113
      %p115 = pneg %p114
      // Predicated region
      $region9: #{tpu_custom_call.1} parent=5 // pred_check
        _
      $region10: #{tpu_custom_call.1} parent=5 // pred_check_branch
        %117 = sbr.rel (%p114) target = $region12
      $region11: #{tpu_custom_call.1} parent=5 // pred_region
        %s118 = ssub.s32 %s15, 1
        // Predicated region
        $region13: #{tpu_custom_call.1} parent=11 // pred_check
          %p119 = pneg %p76
        $region14: #{tpu_custom_call.1} parent=11 // pred_check_branch
          %121 = sbr.rel (%p119) target = $region16
        $region15: #{tpu_custom_call.1} parent=11 // pred_region
          %s123 = ssub.s32 1024, 1024
          %124 = vsyncadd [#allocation6], %s123
          %s125 = sshll.u32 [#allocation5], 4
          %s126 = int_to_ptr.vmem [resolvable:$true] %s125
          %131 = dma.hbm_to_vmem [thread:$0]  %s1, 1024, %s126, [#allocation6], 256, 256, 16
        $region16: #{tpu_custom_call.1} parent=11 // pred_fallthru
          _
      $region12: #{tpu_custom_call.1} parent=5 // pred_fallthru
        _
      %p132 = scmp.lt.s32.totalorder %s15, 2
      // Predicated region
      $region17: #{tpu_custom_call.1} parent=5 // pred_check
        %p133 = pneg %p132
      $region18: #{tpu_custom_call.1} parent=5 // pred_check_branch
        %135 = sbr.rel (%p133) target = $region20
      $region19: #{tpu_custom_call.1} parent=5 // pred_region
        // Predicated region
        $region21: #{tpu_custom_call.1} parent=19 // pred_check
          %p136 = pneg %p49
        $region22: #{tpu_custom_call.1} parent=19 // pred_check_branch
          %138 = sbr.rel (%p136) target = $region24
        $region23: #{tpu_custom_call.1} parent=19 // pred_region
          %s139 = sand.u32 %s39, 1
          %s140 = scalar_lea.sflag [#allocation3], %s139
          %s141 = sand.u32 %s39, 1
          %s142 = smul.addr %s141, 8
          %s143 = scalar_lea.vmem [#allocation2], %s142
          %s145 = ssub.s32 128, 128
          %146 = vsyncadd %s140, %s145
          %s147 = sadd.s32 %s23, %s22
          %s148 = smul.addr %s147, 128
          %s149 = scalar_lea.hbm %s0, %s148
          %s151 = sshll.u32 %s143, 4
          %s152 = int_to_ptr.vmem [resolvable:$true] %s151
          %154 = dma.hbm_to_vmem [thread:$0]  %s149, 128, %s152, %s140
        $region24: #{tpu_custom_call.1} parent=19 // pred_fallthru
          _
      $region20: #{tpu_custom_call.1} parent=5 // pred_fallthru
        _
      %p155 = scmp.le.s32.totalorder 1, %s15
      %p156 = scmp.lt.s32.totalorder %s15, 3
      %p157 = pnand %p155, %p156
      %p158 = pneg %p157
      // Predicated region
      $region25: #{tpu_custom_call.1} parent=5 // pred_check
        _
      $region26: #{tpu_custom_call.1} parent=5 // pred_check_branch
        %160 = sbr.rel (%p157) target = $region28
      $region27: #{tpu_custom_call.1} parent=5 // pred_region
        %s161 = ssub.s32 %s15, 1
        %s162 = sand.u32 %s42, 1
        %s163 = scalar_lea.sflag [#allocation3], %s162
        %s164 = sand.u32 %s42, 1
        %s165 = smul.addr %s164, 8
        %s166 = scalar_lea.vmem [#allocation2], %s165
        // Predicated region
        $region29: #{tpu_custom_call.1} parent=27 // pred_check
          %p167 = pneg %p55
        $region30: #{tpu_custom_call.1} parent=27 // pred_check_branch
          %169 = sbr.rel (%p167) target = $region32
        $region31: #{tpu_custom_call.1} parent=27 // pred_region
          %170 = dma.done %s163, 128
        $region32: #{tpu_custom_call.1} parent=27 // pred_fallthru
          _
        // Predicated region
        $region33: #{tpu_custom_call.1} parent=27 // pred_check
          %p171 = pneg %p76
        $region34: #{tpu_custom_call.1} parent=27 // pred_check_branch
          %173 = sbr.rel (%p171) target = $region36
        $region35: #{tpu_custom_call.1} parent=27 // pred_region
          %174 = dma.done [#allocation6], 1024
        $region36: #{tpu_custom_call.1} parent=27 // pred_fallthru
          _
        %s175 = sand.u32 %s42, 1
        %s176 = scalar_lea.sflag [#allocation3], %s175
        %s177 = sand.u32 %s42, 1
        %s178 = smul.addr %s177, 8
        %s179 = scalar_lea.vmem [#allocation2], %s178
        %p180 = pneg %p55
        %p181 = pneg %p52
        %p182 = pneg %p76
        %p183 = pneg %p73
        %p184 = pneg %p104
        %p185 = pneg %p101
        %s186 = sand.u32 %s91, 1
        %s187 = scalar_lea.sflag [#allocation4], %s186
        %s188 = sand.u32 %s91, 1
        %s189 = smul.addr %s188, 16
        %s190 = scalar_lea.vmem [#allocation7], %s189
        %v191 = vld [vmem:[%s166] sm:$0xff]
        %v192 = vld [vmem:[#allocation5] sm:$0xff]
        %v193 = vld [vmem:[#allocation5 + $0x8] sm:$0xff]
        %v194 = vld [vmem:[#allocation5 + $0x10] sm:$0xff]
        %v195 = vld [vmem:[#allocation5 + $0x18] sm:$0xff]
        %v196 = vld [vmem:[#allocation5 + $0x20] sm:$0xff]
        %v197 = vld [vmem:[#allocation5 + $0x28] sm:$0xff]
        %v198 = vld [vmem:[#allocation5 + $0x30] sm:$0xff]
        %v199 = vld [vmem:[#allocation5 + $0x38] sm:$0xff]
        %vm200 = vcmask 261120
        %v202 = vsel %vm200, %v191, 0
        %204 = vmatprep.subr.mxu0 %v193
        %205 = vmatpush1.msra.mxu0 %v192
        %206 = vmatprep.subr.mxu0 %v195
        %207 = vmatpush1.msra.mxu0 %v194
        %208 = vmatprep.subr.mxu0 %v197
        %209 = vmatpush1.msra.mxu0 %v196
        %210 = vmatprep.subr.mxu0 %v199
        %211 = vmatpush1.msra.mxu0 %v198
        %212 = vmatprep.subr.mxu0 0.0
        %213 = vmatpush1.msra.mxu0 0.0
        %214 = vmatprep.subr.mxu0 0.0
        %215 = vmatpush1.msra.mxu0 0.0
        %216 = vmatprep.subr.mxu0 0.0
        %217 = vmatpush1.msra.mxu0 0.0
        %218 = vmatprep.subr.mxu0 0.0
        %219 = vmatpush1.msra.mxu0 0.0
        %220 = vmatprep.subr.mxu0 0.0
        %221 = vmatpush1.msra.mxu0 0.0
        %222 = vmatprep.subr.mxu0 0.0
        %223 = vmatpush1.msra.mxu0 0.0
        %224 = vmatprep.subr.mxu0 0.0
        %225 = vmatpush1.msra.mxu0 0.0
        %226 = vmatprep.subr.mxu0 0.0
        %227 = vmatpush1.msra.mxu0 0.0
        %228 = vmatprep.subr.mxu0 0.0
        %229 = vmatpush1.msra.mxu0 0.0
        %230 = vmatprep.subr.mxu0 0.0
        %231 = vmatpush1.msra.mxu0 0.0
        %232 = vmatprep.subr.mxu0 0.0
        %233 = vmatpush1.msra.mxu0 0.0
        %234 = vmatprep.subr.mxu0 0.0
        %235 = vmatpush1.msra.mxu0 0.0
        %236 = vmatprep.subr.mxu0 0.0
        %237 = vmatpush1.msra.mxu0 0.0
        %238 = vmatprep.subr.mxu0 0.0
        %239 = vmatpush1.msra.mxu0 0.0
        %240 = vmatprep.subr.mxu0 0.0
        %241 = vmatpush1.msra.mxu0 0.0
        %242 = vmatprep.subr.mxu0 0.0
        %243 = vmatpush1.msra.mxu0 0.0
        %244 = vmatprep.subr.mxu0 0.0
        %245 = vmatpush1.msra.mxu0 0.0
        %246 = vmatprep.subr.mxu0 0.0
        %247 = vmatpush1.msra.mxu0 0.0
        %248 = vmatprep.subr.mxu0 0.0
        %249 = vmatpush1.msra.mxu0 0.0
        %250 = vmatprep.subr.mxu0 0.0
        %251 = vmatpush1.msra.mxu0 0.0
        %252 = vmatprep.subr.mxu0 0.0
        %253 = vmatpush1.msra.mxu0 0.0
        %254 = vmatprep.subr.mxu0 0.0
        %255 = vmatpush1.msra.mxu0 0.0
        %256 = vmatprep.subr.mxu0 0.0
        %257 = vmatpush1.msra.mxu0 0.0
        %258 = vmatprep.subr.mxu0 0.0
        %259 = vmatpush1.msra.mxu0 0.0
        %260 = vmatprep.subr.mxu0 0.0
        %261 = vmatpush1.msra.mxu0 0.0
        %262 = vmatprep.subr.mxu0 0.0
        %263 = vmatpush1.msra.mxu0 0.0
        %264 = vmatprep.subr.mxu0 0.0
        %265 = vmatpush1.msra.mxu0 0.0
        %266 = vmatprep.subr.mxu0 0.0
        %267 = vmatpush1.msra.mxu0 0.0
        %268 = vmatprep.mubr.f32.mxu0 0.0
        %269 = vmatmul.mubr.f32.gmra.mrb[0].mxu0 %v202
        %v270 = vpop.f32.mrb[0].mxu0
        %v271 = vadd.f32 0.0, %v270
        %v272 = vpop.f32.mrb[0].mxu0
        %v273 = vadd.f32 0.0, %v272
        %274 = vdwg.mxu0
        %275 = vst [vmem:[%s190] sm:$0xff] %v271
        %vm276 = vcmask 523264
        %277 = vst.msk [vmem:[%s190 + $0x8] sm:$0xff] %vm276, %v273
        %s278 = sand.u32 %s91, 1
        %s279 = scalar_lea.sflag [#allocation4], %s278
        %s280 = sand.u32 %s91, 1
        %s281 = smul.addr %s280, 16
        %s282 = scalar_lea.vmem [#allocation7], %s281
        // Predicated region
        $region37: #{tpu_custom_call.1} parent=27 // pred_check
          %p283 = pneg %p101
        $region38: #{tpu_custom_call.1} parent=27 // pred_check_branch
          %285 = sbr.rel (%p283) target = $region40
        $region39: #{tpu_custom_call.1} parent=27 // pred_region
          %s287 = ssub.s32 256, 256
          %288 = vsyncadd %s279, %s287
          %s289 = smul.addr %s25, 2
          %s290 = smul.addr %s24, 2
          %s291 = sadd.s32 %s289, %s290
          %s292 = smul.addr %s291, 128
          %s293 = scalar_lea.hbm %s2, %s292
          %s295 = sshll.u32 %s282, 4
          %s296 = int_to_ptr.vmem [resolvable:$true] %s295
          %298 = dma.vmem_to_hbm [thread:$0]  %s296, 256, %s293, %s279
        $region40: #{tpu_custom_call.1} parent=27 // pred_fallthru
          _
      $region28: #{tpu_custom_call.1} parent=5 // pred_fallthru
        _
      %p299 = scmp.le.s32.totalorder 2, %s15
      // Predicated region
      $region41: #{tpu_custom_call.1} parent=5 // pred_check
        %p300 = pneg %p299
      $region42: #{tpu_custom_call.1} parent=5 // pred_check_branch
        %302 = sbr.rel (%p300) target = $region44
      $region43: #{tpu_custom_call.1} parent=5 // pred_region
        %s303 = ssub.s32 %s15, 2
        // Predicated region
        $region45: #{tpu_custom_call.1} parent=43 // pred_check
          %p304 = pneg %p107
        $region46: #{tpu_custom_call.1} parent=43 // pred_check_branch
          %306 = sbr.rel (%p304) target = $region48
        $region47: #{tpu_custom_call.1} parent=43 // pred_region
          %s307 = sand.u32 %s92, 1
          %s308 = scalar_lea.sflag [#allocation4], %s307
          %s309 = sand.u32 %s92, 1
          %s310 = smul.addr %s309, 16
          %s311 = scalar_lea.vmem [#allocation7], %s310
          %312 = dma.done %s308, 256
        $region48: #{tpu_custom_call.1} parent=43 // pred_fallthru
          _
      $region44: #{tpu_custom_call.1} parent=5 // pred_fallthru
        _
    $region6: #{tpu_custom_call.1} parent=1 // loop_footer
      %s19 = sadd.s32 1, %s15
    $region7: #{tpu_custom_call.1} parent=1 // loop_footer_branch
      %14 = sbr.rel target = $region3
    $region8: #{tpu_custom_call.1} parent=1 // loop_exit
      _
    %313 = vsyncpa [#allocation3], 1
    %s314 = scalar_lea.sflag [#allocation3], 1
    %315 = vsyncpa %s314, 1
    %316 = vsyncpa [#allocation6], 1
    %317 = vsyncpa [#allocation4], 1
    %s318 = scalar_lea.sflag [#allocation4], 1
    %319 = vsyncpa %s318, 1

</llo_original>
